<compile_context>
chip_gen: v7x
topology: tpu7x:2x2x1
jax: 0.10.0
libtpu: 0.0.40
codegen_flags: <defaults>
</compile_context>

<pallas_src>
import jax
import jax.numpy as jnp
from jax.experimental import pallas as pl
from jax.experimental.pallas import tpu as pltpu


def _mlp_forecaster_kernel(x_ref, w1_ref, b1_ref, w2_ref, b2_ref, c_ref, o_ref):
    # fc1: x streamed f32, packed to bf16 on the VPU just before the MXU; f32 accumulation.
    x_bf = x_ref[...].astype(jnp.bfloat16)
    h = jnp.dot(x_bf, w1_ref[...], preferred_element_type=jnp.float32)
    h = h + b1_ref[...]                       # f32 bias add (v5e-safe VPU path)

    # dropout: nn.Dropout is identity at inference time.
    # TODO(synk): training-mode dropout (random masking) not implemented.

    # fc2: bf16 operands, f32 accumulation on the MXU.
    y = jnp.dot(h.astype(jnp.bfloat16), w2_ref[...],
                preferred_element_type=jnp.float32)
    y = y + b2_ref[...]

    # Residual add of last-timestep coords broadcast to the interleaved flat layout
    # out[b, 2k + j] += coords_last[b, j].  Parity mask is a single (1, OUT_PAD) row;
    # jnp.where broadcasts it (avoids a full (bb, OUT_PAD) int32 iota per grid step).
    out_pad = o_ref.shape[1]
    parity = jax.lax.broadcasted_iota(jnp.int32, (1, out_pad), 1) & 1
    c = c_ref[...]                                            # (bb, 2) f32
    coords_b = jnp.where(parity == 0, c[:, 0:1], c[:, 1:2])   # (bb, OUT_PAD)

    o_ref[...] = y + coords_b


def _choose_block_b(B, block_b):
    if B > block_b:
        return block_b                 # multiple of 8 & 128 by construction
    # Whole batch fits in one tile.  If it is large and splits cleanly, use two
    # blocks so both v7x TensorCores get work (no effect on single-TC v5e/v6e).
    if B >= 512 and B % 16 == 0:
        return B // 2
    return B


def mlp_forecaster(interactor_embs, coords, w1, b1, w2, b2, *, block_b=2048):
    B, IN = interactor_embs.shape
    H = w1.shape[1]
    OUT = w2.shape[1]
    n_pts = OUT // 2

    # --- weight prep (wrapper-side, amortizable / cacheable across calls) ----
    OUT_PAD = ((OUT + 127) // 128) * 128       # lane-dense output stores
    if OUT_PAD != OUT:
        w2 = jnp.pad(w2, ((0, 0), (0, OUT_PAD - OUT)))
        b2 = jnp.pad(b2, ((0, 0), (0, OUT_PAD - OUT)))
    w1_bf = w1.astype(jnp.bfloat16)
    w2_bf = w2.astype(jnp.bfloat16)

    x_f32 = interactor_embs                    # streamed f32; bf16 pack happens in-kernel
    coords_last = coords[:, -1, :]             # (B, 2) f32

    # --- batch tiling ---------------------------------------------------------
    bb = _choose_block_b(B, block_b)
    B_PAD = ((B + bb - 1) // bb) * bb
    if B_PAD != B:
        x_f32 = jnp.pad(x_f32, ((0, B_PAD - B), (0, 0)))
        coords_last = jnp.pad(coords_last, ((0, B_PAD - B), (0, 0)))
    grid = (B_PAD // bb,)

    # --- VMEM budget (explicit; matters on v7x's 64 MiB / 32 MiB scoped) ------
    vmem_weights = (IN * H + H * OUT_PAD) * 2 + (H + OUT_PAD) * 4        # Buffered(1)
    vmem_io = 2 * (bb * IN * 4 + bb * OUT_PAD * 4 + bb * 128 * 4)        # double-buffered
    vmem_tmp = bb * H * 4 + bb * H * 2 + 2 * bb * OUT_PAD * 4            # h/f32, h/bf16, y
    vmem_limit = int(min(100 * 2**20, max(32 * 2**20, 2 * (vmem_weights + vmem_io + vmem_tmp))))

    flops = 2 * B_PAD * IN * H + 2 * B_PAD * H * OUT_PAD
    bytes_accessed = (x_f32.size * 4 + w1_bf.size * 2 + w2_bf.size * 2
                      + b1.size * 4 + b2.size * 4 + coords_last.size * 4
                      + B_PAD * OUT_PAD * 4)

    resident = dict(pipeline_mode=pl.Buffered(1))   # constant index_map -> single buffer

    out_flat = pl.pallas_call(
        _mlp_forecaster_kernel,
        out_shape=jax.ShapeDtypeStruct((B_PAD, OUT_PAD), jnp.float32),
        grid=grid,
        in_specs=[
            pl.BlockSpec((bb, IN), lambda i: (i, 0)),                   # x tile over B
            pl.BlockSpec((IN, H), lambda i: (0, 0), **resident),        # W1 (VMEM-resident)
            pl.BlockSpec((1, H), lambda i: (0, 0), **resident),         # b1
            pl.BlockSpec((H, OUT_PAD), lambda i: (0, 0), **resident),   # W2 (VMEM-resident)
            pl.BlockSpec((1, OUT_PAD), lambda i: (0, 0), **resident),   # b2
            pl.BlockSpec((bb, 2), lambda i: (i, 0)),                    # coords last step
        ],
        out_specs=pl.BlockSpec((bb, OUT_PAD), lambda i: (i, 0)),
        compiler_params=pltpu.CompilerParams(
            dimension_semantics=("parallel",),          # shards B blocks across v7x TCs
            vmem_limit_bytes=vmem_limit),
        cost_estimate=pl.CostEstimate(
            flops=flops, transcendentals=0, bytes_accessed=bytes_accessed),
    )(x_f32, w1_bf, b1, w2_bf, b2, coords_last)

    # NOTE: columns OUT..OUT_PAD-1 are padding garbage and must never be consumed.
    # A throughput-critical consumer can accept the padded (B_PAD, OUT_PAD) slab directly
    # and slice lazily at its use site to avoid this extra HBM pass; here we keep the
    # module's exact (B, n_pts, 2) output contract.
    return out_flat[:B, :OUT].reshape(B, n_pts, 2)


def _reference(interactor_embs, coords, w1, b1, w2, b2):
    x = interactor_embs @ w1 + b1            # fc1 (f32 reference)
    x = x @ w2 + b2                          # fc2 (dropout identity in eval)
    x = x.reshape(x.shape[0], -1, 2)
    return coords[:, -1:] + x


if __name__ == "__main__":
    # Module defaults: input_size=256, fc1_size=512, fc2_size=2*40
    IN, H, OUT = 256, 512, 2 * 40
    B, T = 8, 5

    key = jax.random.PRNGKey(0)
    k_emb, k_coords, k_w1, k_b1, k_w2, k_b2 = jax.random.split(key, 6)

    interactor_embs = jax.random.normal(k_emb, (B, IN), dtype=jnp.float32)
    coords = jax.random.normal(k_coords, (B, T, 2), dtype=jnp.float32)

    # nn.Linear weights stored transposed: (in_features, out_features)
    w1 = jax.random.normal(k_w1, (IN, H), dtype=jnp.float32) * 0.02
    b1 = jax.random.normal(k_b1, (1, H), dtype=jnp.float32) * 0.02
    w2 = jax.random.normal(k_w2, (H, OUT), dtype=jnp.float32) * 0.02
    b2 = jax.random.normal(k_b2, (1, OUT), dtype=jnp.float32) * 0.02

    out = mlp_forecaster(interactor_embs, coords, w1, b1, w2, b2)
    out = jax.block_until_ready(out)

    ref = _reference(interactor_embs, coords, w1, b1, w2, b2)
    assert out.shape == (B, OUT // 2, 2), out.shape
    # bf16 weight streaming + bf16 re-cast of h vs f32 reference -> loosened tolerance.
    assert jnp.allclose(out, ref, atol=2e-2, rtol=2e-2), "mismatch vs reference"

    print("KERNEL_OK")
</pallas_src>

<mosaic_0001>
module attributes {stable_mosaic.version = 11 : i64} {
  func.func @_mlp_forecaster_kernel(%arg0: i32, %arg1: memref<8x256xf32, #tpu.memory_space<vmem>>, %arg2: memref<256x512xbf16, #tpu.memory_space<vmem>>, %arg3: memref<1x512xf32, #tpu.memory_space<vmem>>, %arg4: memref<512x128xbf16, #tpu.memory_space<vmem>>, %arg5: memref<1x128xf32, #tpu.memory_space<vmem>>, %arg6: memref<8x2xf32, #tpu.memory_space<vmem>>, %arg7: memref<8x128xf32, #tpu.memory_space<vmem>>) attributes {dimension_semantics = [#tpu.dimension_semantics<parallel>], iteration_bounds = array<i64: 1>, scalar_prefetch = 0 : i64, scratch_operands = 0 : i64, tpu.core_type = #tpu.core_type<tc>, window_params = [{transform_indices = @transform_0, window_bounds = array<i64: 8, 256>}, {pipeline_mode = #tpu.pipeline_mode<synchronous>, transform_indices = @transform_1, window_bounds = array<i64: 256, 512>}, {pipeline_mode = #tpu.pipeline_mode<synchronous>, transform_indices = @transform_2, window_bounds = array<i64: 1, 512>}, {pipeline_mode = #tpu.pipeline_mode<synchronous>, transform_indices = @transform_3, window_bounds = array<i64: 512, 128>}, {pipeline_mode = #tpu.pipeline_mode<synchronous>, transform_indices = @transform_4, window_bounds = array<i64: 1, 128>}, {transform_indices = @transform_5, window_bounds = array<i64: 8, 2>}, {transform_indices = @transform_6, window_bounds = array<i64: 8, 128>}]} {
    %c0 = arith.constant 0 : index
    %c0_0 = arith.constant 0 : index
    %0 = vector.load %arg1[%c0, %c0_0] : memref<8x256xf32, #tpu.memory_space<vmem>>, vector<8x256xf32>
    %1 = arith.truncf %0 : vector<8x256xf32> to vector<8x256xbf16>
    %c0_1 = arith.constant 0 : index
    %c0_2 = arith.constant 0 : index
    %2 = vector.load %arg2[%c0_1, %c0_2] : memref<256x512xbf16, #tpu.memory_space<vmem>>, vector<256x512xbf16>
    %cst = arith.constant dense<0.000000e+00> : vector<8x512xf32>
    %3 = tpu.matmul %1, %2, %cst {dimension_numbers = #tpu.dot_dimension_numbers<[1], [0], [0], [1], [0, 0, 1, 1], [], []>} : vector<8x256xbf16>, vector<256x512xbf16>, vector<8x512xf32> -> vector<8x512xf32>
    %c0_3 = arith.constant 0 : index
    %c0_4 = arith.constant 0 : index
    %4 = vector.load %arg3[%c0_3, %c0_4] : memref<1x512xf32, #tpu.memory_space<vmem>>, vector<1x512xf32>
    %5 = vector.broadcast %4 : vector<1x512xf32> to vector<8x512xf32>
    %6 = arith.addf %3, %5 : vector<8x512xf32>
    %7 = arith.truncf %6 : vector<8x512xf32> to vector<8x512xbf16>
    %c0_5 = arith.constant 0 : index
    %c0_6 = arith.constant 0 : index
    %8 = vector.load %arg4[%c0_5, %c0_6] : memref<512x128xbf16, #tpu.memory_space<vmem>>, vector<512x128xbf16>
    %cst_7 = arith.constant dense<0.000000e+00> : vector<8x128xf32>
    %9 = tpu.matmul %7, %8, %cst_7 {dimension_numbers = #tpu.dot_dimension_numbers<[1], [0], [0], [1], [0, 0, 1, 1], [], []>} : vector<8x512xbf16>, vector<512x128xbf16>, vector<8x128xf32> -> vector<8x128xf32>
    %c0_8 = arith.constant 0 : index
    %c0_9 = arith.constant 0 : index
    %10 = vector.load %arg5[%c0_8, %c0_9] : memref<1x128xf32, #tpu.memory_space<vmem>>, vector<1x128xf32>
    %11 = vector.broadcast %10 : vector<1x128xf32> to vector<8x128xf32>
    %12 = arith.addf %9, %11 : vector<8x128xf32>
    %13 = tpu.iota {dimensions = array<i32: 1>} : vector<1x128xi32>
    %c1_i32 = arith.constant 1 : i32
    %14 = vector.broadcast %c1_i32 : i32 to vector<1x128xi32>
    %15 = arith.andi %13, %14 : vector<1x128xi32>
    %c0_10 = arith.constant 0 : index
    %c0_11 = arith.constant 0 : index
    %16 = vector.load %arg6[%c0_10, %c0_11] : memref<8x2xf32, #tpu.memory_space<vmem>>, vector<8x2xf32>
    %c0_i32 = arith.constant 0 : i32
    %17 = vector.broadcast %c0_i32 : i32 to vector<1x128xi32>
    %18 = arith.cmpi eq, %15, %17 : vector<1x128xi32>
    %19 = vector.extract_strided_slice %16 {offsets = [0, 0], sizes = [8, 1], strides = [1, 1]} : vector<8x2xf32> to vector<8x1xf32>
    %20 = vector.extract_strided_slice %16 {offsets = [0, 1], sizes = [8, 1], strides = [1, 1]} : vector<8x2xf32> to vector<8x1xf32>
    %21 = vector.shape_cast %18 : vector<1x128xi1> to vector<1x128xi1>
    %22 = vector.broadcast %21 : vector<1x128xi1> to vector<8x128xi1>
    %23 = vector.shape_cast %19 : vector<8x1xf32> to vector<8x1xf32>
    %24 = vector.broadcast %23 : vector<8x1xf32> to vector<8x128xf32>
    %25 = vector.shape_cast %20 : vector<8x1xf32> to vector<8x1xf32>
    %26 = vector.broadcast %25 : vector<8x1xf32> to vector<8x128xf32>
    %27 = arith.select %22, %24, %26 : vector<8x128xi1>, vector<8x128xf32>
    %28 = arith.addf %12, %27 : vector<8x128xf32>
    %c0_12 = arith.constant 0 : index
    %c0_13 = arith.constant 0 : index
    %29 = vector.load %arg7[%c0_12, %c0_13] : memref<8x128xf32, #tpu.memory_space<vmem>>, vector<8x128xf32>
    tpu.vector_store %arg7[%c0_12, %c0_13], %28 {strides = array<i32>} : memref<8x128xf32, #tpu.memory_space<vmem>>, vector<8x128xf32>,
    return
  }
  func.func @transform_0(%arg0: i32) -> (i32, i32) {
    %c0_i32 = arith.constant 0 : i32
    %c0_i32_0 = arith.constant 0 : i32
    return %arg0, %c0_i32 : i32, i32
  }
  func.func @transform_1(%arg0: i32) -> (i32, i32) {
    %c0_i32 = arith.constant 0 : i32
    %c0_i32_0 = arith.constant 0 : i32
    %c0_i32_1 = arith.constant 0 : i32
    return %c0_i32, %c0_i32_0 : i32, i32
  }
  func.func @transform_2(%arg0: i32) -> (i32, i32) {
    %c0_i32 = arith.constant 0 : i32
    %c0_i32_0 = arith.constant 0 : i32
    %c0_i32_1 = arith.constant 0 : i32
    return %c0_i32, %c0_i32_0 : i32, i32
  }
  func.func @transform_3(%arg0: i32) -> (i32, i32) {
    %c0_i32 = arith.constant 0 : i32
    %c0_i32_0 = arith.constant 0 : i32
    %c0_i32_1 = arith.constant 0 : i32
    return %c0_i32, %c0_i32_0 : i32, i32
  }
  func.func @transform_4(%arg0: i32) -> (i32, i32) {
    %c0_i32 = arith.constant 0 : i32
    %c0_i32_0 = arith.constant 0 : i32
    %c0_i32_1 = arith.constant 0 : i32
    return %c0_i32, %c0_i32_0 : i32, i32
  }
  func.func @transform_5(%arg0: i32) -> (i32, i32) {
    %c0_i32 = arith.constant 0 : i32
    %c0_i32_0 = arith.constant 0 : i32
    return %arg0, %c0_i32 : i32, i32
  }
  func.func @transform_6(%arg0: i32) -> (i32, i32) {
    %c0_i32 = arith.constant 0 : i32
    %c0_i32_0 = arith.constant 0 : i32
    return %arg0, %c0_i32 : i32, i32
  }
}

</mosaic_0001>

<llo_original>
// kernel: tpu_custom_call.1
$region0: #{tpu_custom_call.1}
  #allocation0 [shape = 'u32[]', space=smem, size = 0x4, offset = 0x4, fixed_abs, tag = 'smem constant byte address 0x4 - core index']
  #allocation1 [shape = 'u32[144,128]{1,0:T(1,128)}', space=vmem, size = 0x12000, scoped, tag = 'internal scratch']
  %s0 = inlined_call_operand.hbm [shape: f32[8,256], index: 0, kind: input, shape index: {}]
  %s1 = inlined_call_operand.hbm [shape: bf16[256,512], index: 1, kind: input, shape index: {}]
  %s2 = inlined_call_operand.vmem [shape: f32[1,512], index: 2, kind: input, shape index: {}]
  %s3 = inlined_call_operand.hbm [shape: bf16[512,128], index: 3, kind: input, shape index: {}]
  %s4 = inlined_call_operand.vmem [shape: f32[1,128], index: 4, kind: input, shape index: {}]
  %s5 = inlined_call_operand.vmem [shape: f32[8,2], index: 5, kind: input, shape index: {}]
  %s6 = inlined_call_operand.hbm [shape: f32[8,128], index: 6, kind: output, shape index: {}]
  %s7 = sld [smem:[#allocation0]]
  $region46: #{tpu_custom_call.1} parent=0
    _
  %s9 = ssub.s32 1, %s7
  %s10 = scalar_select 0, %s9, %s7
  $region1: #{tpu_custom_call.1} parent=0
    #allocation2 [shape = 'u8[8192]{0}', space=vmem, size = 0x2000, scoped, tag = 'input window, operand 0, single buffered']
    #allocation3 [shape = 's32[1]{0}', space=sflag, size = 0x4, scoped, tag = 'scoped memory for tpu_custom_call.1']
    #allocation4 [shape = 's32[1]{0}', space=sflag, size = 0x4, scoped, tag = 'scoped memory for tpu_custom_call.1']
    #allocation5 [shape = 'u8[262144]{0}', space=vmem, size = 0x40000, scoped, tag = 'input window, operand 1, single buffered']
    #allocation6 [shape = 's32[1]{0}', space=sflag, size = 0x4, scoped, tag = 'scoped memory for tpu_custom_call.1']
    #allocation7 [shape = 'u8[131072]{0}', space=vmem, size = 0x20000, scoped, tag = 'input window, operand 3, single buffered']
    #allocation8 [shape = 'u8[4096]{0}', space=vmem, size = 0x1000, scoped, tag = 'output window, operand 0, single buffered']
    %11 = vsyncpa [#allocation3], 0
    %12 = vsyncpa [#allocation6], 0
    %13 = vsyncpa [#allocation4], 0
    // Predicated region
    $region2: #{tpu_custom_call.1} parent=1 // pred_check
      _
    $region3: #{tpu_custom_call.1} parent=1 // pred_check_branch
      %15 = sbr.rel (0) target = $region5
    $region4: #{tpu_custom_call.1} parent=1 // pred_region
      %s17 = ssub.s32 256, 256
      %18 = vsyncadd [#allocation3], %s17
      %s20 = sshll.u32 [#allocation2], 4
      %s21 = int_to_ptr.vmem [resolvable:$true] %s20
      %23 = dma.hbm_to_vmem [thread:$0]  %s0, 256, %s21, [#allocation3]
    $region5: #{tpu_custom_call.1} parent=1 // pred_fallthru
      _
    // Predicated region
    $region6: #{tpu_custom_call.1} parent=1 // pred_check
      _
    $region7: #{tpu_custom_call.1} parent=1 // pred_check_branch
      %25 = sbr.rel (0) target = $region9
    $region8: #{tpu_custom_call.1} parent=1 // pred_region
      %s27 = ssub.s32 8192, 8192
      %28 = vsyncadd [#allocation6], %s27
      %s29 = sshll.u32 [#allocation5], 4
      %s30 = int_to_ptr.vmem [resolvable:$true] %s29
      %35 = dma.hbm_to_vmem [thread:$0]  %s1, 8192, %s30, [#allocation6], 256, 256, 16
    $region9: #{tpu_custom_call.1} parent=1 // pred_fallthru
      _
    // Predicated region
    $region10: #{tpu_custom_call.1} parent=1 // pred_check
      _
    $region11: #{tpu_custom_call.1} parent=1 // pred_check_branch
      %37 = sbr.rel (0) target = $region13
    $region12: #{tpu_custom_call.1} parent=1 // pred_region
      _
    $region13: #{tpu_custom_call.1} parent=1 // pred_fallthru
      _
    // Predicated region
    $region14: #{tpu_custom_call.1} parent=1 // pred_check
      _
    $region15: #{tpu_custom_call.1} parent=1 // pred_check_branch
      %39 = sbr.rel (0) target = $region17
    $region16: #{tpu_custom_call.1} parent=1 // pred_region
      %s41 = ssub.s32 4096, 4096
      %42 = vsyncadd [#allocation6], %s41
      %s43 = sshll.u32 [#allocation7], 4
      %s44 = int_to_ptr.vmem [resolvable:$true] %s43
      %49 = dma.hbm_to_vmem [thread:$0]  %s3, 4096, %s44, [#allocation6], 64, 64, 4
    $region17: #{tpu_custom_call.1} parent=1 // pred_fallthru
      _
    // Predicated region
    $region18: #{tpu_custom_call.1} parent=1 // pred_check
      _
    $region19: #{tpu_custom_call.1} parent=1 // pred_check_branch
      %51 = sbr.rel (0) target = $region21
    $region20: #{tpu_custom_call.1} parent=1 // pred_region
      _
    $region21: #{tpu_custom_call.1} parent=1 // pred_fallthru
      _
    // Predicated region
    $region22: #{tpu_custom_call.1} parent=1 // pred_check
      _
    $region23: #{tpu_custom_call.1} parent=1 // pred_check_branch
      %53 = sbr.rel (0) target = $region25
    $region24: #{tpu_custom_call.1} parent=1 // pred_region
      _
    $region25: #{tpu_custom_call.1} parent=1 // pred_fallthru
      _
    // Predicated region
    $region26: #{tpu_custom_call.1} parent=1 // pred_check
      _
    $region27: #{tpu_custom_call.1} parent=1 // pred_check_branch
      %55 = sbr.rel (0) target = $region29
    $region28: #{tpu_custom_call.1} parent=1 // pred_region
      %56 = dma.done [#allocation3], 256
    $region29: #{tpu_custom_call.1} parent=1 // pred_fallthru
      _
    // Predicated region
    $region30: #{tpu_custom_call.1} parent=1 // pred_check
      _
    $region31: #{tpu_custom_call.1} parent=1 // pred_check_branch
      %58 = sbr.rel (0) target = $region33
    $region32: #{tpu_custom_call.1} parent=1 // pred_region
      %59 = dma.done [#allocation6], 8192
    $region33: #{tpu_custom_call.1} parent=1 // pred_fallthru
      _
    // Predicated region
    $region34: #{tpu_custom_call.1} parent=1 // pred_check
      _
    $region35: #{tpu_custom_call.1} parent=1 // pred_check_branch
      %61 = sbr.rel (0) target = $region37
    $region36: #{tpu_custom_call.1} parent=1 // pred_region
      %62 = dma.done [#allocation6], 4096
    $region37: #{tpu_custom_call.1} parent=1 // pred_fallthru
      _
    %v64 = vld [vmem:[#allocation2] sm:$0xff]
    %v65 = vld [vmem:[#allocation2 + $0x8] sm:$0xff]
    %v66 = vpack.c.bf16 %v64, %v64
    %v67 = vpack.c.bf16 %v65, %v65
    %v68 = vld [vmem:[#allocation5] sm:$0xff]
    %v69 = vld [vmem:[#allocation5 + $0x8] sm:$0xff]
    %v70 = vld [vmem:[#allocation5 + $0x10] sm:$0xff]
    %v71 = vld [vmem:[#allocation5 + $0x18] sm:$0xff]
    %v72 = vld [vmem:[#allocation5 + $0x20] sm:$0xff]
    %v73 = vld [vmem:[#allocation5 + $0x28] sm:$0xff]
    %v74 = vld [vmem:[#allocation5 + $0x30] sm:$0xff]
    %v75 = vld [vmem:[#allocation5 + $0x38] sm:$0xff]
    %v76 = vld [vmem:[#allocation5 + $0x40] sm:$0xff]
    %v77 = vld [vmem:[#allocation5 + $0x48] sm:$0xff]
    %v78 = vld [vmem:[#allocation5 + $0x50] sm:$0xff]
    %v79 = vld [vmem:[#allocation5 + $0x58] sm:$0xff]
    %v80 = vld [vmem:[#allocation5 + $0x60] sm:$0xff]
    %v81 = vld [vmem:[#allocation5 + $0x68] sm:$0xff]
    %v82 = vld [vmem:[#allocation5 + $0x70] sm:$0xff]
    %v83 = vld [vmem:[#allocation5 + $0x78] sm:$0xff]
    %v84 = vld [vmem:[#allocation5 + $0x80] sm:$0xff]
    %v85 = vld [vmem:[#allocation5 + $0x88] sm:$0xff]
    %v86 = vld [vmem:[#allocation5 + $0x90] sm:$0xff]
    %v87 = vld [vmem:[#allocation5 + $0x98] sm:$0xff]
    %v88 = vld [vmem:[#allocation5 + $0xa0] sm:$0xff]
    %v89 = vld [vmem:[#allocation5 + $0xa8] sm:$0xff]
    %v90 = vld [vmem:[#allocation5 + $0xb0] sm:$0xff]
    %v91 = vld [vmem:[#allocation5 + $0xb8] sm:$0xff]
    %v92 = vld [vmem:[#allocation5 + $0xc0] sm:$0xff]
    %v93 = vld [vmem:[#allocation5 + $0xc8] sm:$0xff]
    %v94 = vld [vmem:[#allocation5 + $0xd0] sm:$0xff]
    %v95 = vld [vmem:[#allocation5 + $0xd8] sm:$0xff]
    %v96 = vld [vmem:[#allocation5 + $0xe0] sm:$0xff]
    %v97 = vld [vmem:[#allocation5 + $0xe8] sm:$0xff]
    %v98 = vld [vmem:[#allocation5 + $0xf0] sm:$0xff]
    %v99 = vld [vmem:[#allocation5 + $0xf8] sm:$0xff]
    %v100 = vld [vmem:[#allocation5 + $0x100] sm:$0xff]
    %v101 = vld [vmem:[#allocation5 + $0x108] sm:$0xff]
    %v102 = vld [vmem:[#allocation5 + $0x110] sm:$0xff]
    %v103 = vld [vmem:[#allocation5 + $0x118] sm:$0xff]
    %v104 = vld [vmem:[#allocation5 + $0x120] sm:$0xff]
    %v105 = vld [vmem:[#allocation5 + $0x128] sm:$0xff]
    %v106 = vld [vmem:[#allocation5 + $0x130] sm:$0xff]
    %v107 = vld [vmem:[#allocation5 + $0x138] sm:$0xff]
    %v108 = vld [vmem:[#allocation5 + $0x140] sm:$0xff]
    %v109 = vld [vmem:[#allocation5 + $0x148] sm:$0xff]
    %v110 = vld [vmem:[#allocation5 + $0x150] sm:$0xff]
    %v111 = vld [vmem:[#allocation5 + $0x158] sm:$0xff]
    %v112 = vld [vmem:[#allocation5 + $0x160] sm:$0xff]
    %v113 = vld [vmem:[#allocation5 + $0x168] sm:$0xff]
    %v114 = vld [vmem:[#allocation5 + $0x170] sm:$0xff]
    %v115 = vld [vmem:[#allocation5 + $0x178] sm:$0xff]
    %v116 = vld [vmem:[#allocation5 + $0x180] sm:$0xff]
    %v117 = vld [vmem:[#allocation5 + $0x188] sm:$0xff]
    %v118 = vld [vmem:[#allocation5 + $0x190] sm:$0xff]
    %v119 = vld [vmem:[#allocation5 + $0x198] sm:$0xff]
    %v120 = vld [vmem:[#allocation5 + $0x1a0] sm:$0xff]
    %v121 = vld [vmem:[#allocation5 + $0x1a8] sm:$0xff]
    %v122 = vld [vmem:[#allocation5 + $0x1b0] sm:$0xff]
    %v123 = vld [vmem:[#allocation5 + $0x1b8] sm:$0xff]
    %v124 = vld [vmem:[#allocation5 + $0x1c0] sm:$0xff]
    %v125 = vld [vmem:[#allocation5 + $0x1c8] sm:$0xff]
    %v126 = vld [vmem:[#allocation5 + $0x1d0] sm:$0xff]
    %v127 = vld [vmem:[#allocation5 + $0x1d8] sm:$0xff]
    %v128 = vld [vmem:[#allocation5 + $0x1e0] sm:$0xff]
    %v129 = vld [vmem:[#allocation5 + $0x1e8] sm:$0xff]
    %v130 = vld [vmem:[#allocation5 + $0x1f0] sm:$0xff]
    %v131 = vld [vmem:[#allocation5 + $0x1f8] sm:$0xff]
    %v132 = vld [vmem:[%s2] sm:$0xf]
    %v134 = vlaneseq
    %v135 = vshrl.u32 %v134, 7
    %v136 = vsub.s32 0, %v135
    %v137 = vrot.slane %v132, %v136
    %v138 = vlaneseq
    %v139 = vshrl.u32 %v138, 7
    %v140 = vsub.s32 1, %v139
    %v141 = vrot.slane %v132, %v140
    %v142 = vlaneseq
    %v143 = vshrl.u32 %v142, 7
    %v144 = vsub.s32 2, %v143
    %v145 = vrot.slane %v132, %v144
    %v146 = vlaneseq
    %v147 = vshrl.u32 %v146, 7
    %v148 = vsub.s32 3, %v147
    %v149 = vrot.slane %v132, %v148
    %v218 = vunpack.c.l.b16 %v68
    %v219 = vunpack.c.h.b16 %v68
    %v220 = vunpack.c.l.b16 %v69
    %v221 = vunpack.c.h.b16 %v69
    %v222 = vunpack.c.l.b16 %v70
    %v223 = vunpack.c.h.b16 %v70
    %v224 = vunpack.c.l.b16 %v71
    %v225 = vunpack.c.h.b16 %v71
    %v226 = vunpack.c.l.b16 %v72
    %v227 = vunpack.c.h.b16 %v72
    %v228 = vunpack.c.l.b16 %v73
    %v229 = vunpack.c.h.b16 %v73
    %v230 = vunpack.c.l.b16 %v74
    %v231 = vunpack.c.h.b16 %v74
    %v232 = vunpack.c.l.b16 %v75
    %v233 = vunpack.c.h.b16 %v75
    %v234 = vunpack.c.l.b16 %v76
    %v235 = vunpack.c.h.b16 %v76
    %v236 = vunpack.c.l.b16 %v77
    %v237 = vunpack.c.h.b16 %v77
    %v238 = vunpack.c.l.b16 %v78
    %v239 = vunpack.c.h.b16 %v78
    %v240 = vunpack.c.l.b16 %v79
    %v241 = vunpack.c.h.b16 %v79
    %v242 = vunpack.c.l.b16 %v80
    %v243 = vunpack.c.h.b16 %v80
    %v244 = vunpack.c.l.b16 %v81
    %v245 = vunpack.c.h.b16 %v81
    %v246 = vunpack.c.l.b16 %v82
    %v247 = vunpack.c.h.b16 %v82
    %v248 = vunpack.c.l.b16 %v83
    %v249 = vunpack.c.h.b16 %v83
    %v250 = vunpack.c.l.b16 %v84
    %v251 = vunpack.c.h.b16 %v84
    %v252 = vunpack.c.l.b16 %v85
    %v253 = vunpack.c.h.b16 %v85
    %v254 = vunpack.c.l.b16 %v86
    %v255 = vunpack.c.h.b16 %v86
    %v256 = vunpack.c.l.b16 %v87
    %v257 = vunpack.c.h.b16 %v87
    %v258 = vunpack.c.l.b16 %v88
    %v259 = vunpack.c.h.b16 %v88
    %v260 = vunpack.c.l.b16 %v89
    %v261 = vunpack.c.h.b16 %v89
    %v262 = vunpack.c.l.b16 %v90
    %v263 = vunpack.c.h.b16 %v90
    %v264 = vunpack.c.l.b16 %v91
    %v265 = vunpack.c.h.b16 %v91
    %v266 = vunpack.c.l.b16 %v92
    %v267 = vunpack.c.h.b16 %v92
    %v268 = vunpack.c.l.b16 %v93
    %v269 = vunpack.c.h.b16 %v93
    %v270 = vunpack.c.l.b16 %v94
    %v271 = vunpack.c.h.b16 %v94
    %v272 = vunpack.c.l.b16 %v95
    %v273 = vunpack.c.h.b16 %v95
    %v274 = vunpack.c.l.b16 %v96
    %v275 = vunpack.c.h.b16 %v96
    %v276 = vunpack.c.l.b16 %v97
    %v277 = vunpack.c.h.b16 %v97
    %v278 = vunpack.c.l.b16 %v98
    %v279 = vunpack.c.h.b16 %v98
    %v280 = vunpack.c.l.b16 %v99
    %v281 = vunpack.c.h.b16 %v99
    %v282 = vunpack.c.l.b16 %v100
    %v283 = vunpack.c.h.b16 %v100
    %v284 = vunpack.c.l.b16 %v101
    %v285 = vunpack.c.h.b16 %v101
    %v286 = vunpack.c.l.b16 %v102
    %v287 = vunpack.c.h.b16 %v102
    %v288 = vunpack.c.l.b16 %v103
    %v289 = vunpack.c.h.b16 %v103
    %v290 = vunpack.c.l.b16 %v104
    %v291 = vunpack.c.h.b16 %v104
    %v292 = vunpack.c.l.b16 %v105
    %v293 = vunpack.c.h.b16 %v105
    %v294 = vunpack.c.l.b16 %v106
    %v295 = vunpack.c.h.b16 %v106
    %v296 = vunpack.c.l.b16 %v107
    %v297 = vunpack.c.h.b16 %v107
    %v298 = vunpack.c.l.b16 %v108
    %v299 = vunpack.c.h.b16 %v108
    %v300 = vunpack.c.l.b16 %v109
    %v301 = vunpack.c.h.b16 %v109
    %v302 = vunpack.c.l.b16 %v110
    %v303 = vunpack.c.h.b16 %v110
    %v304 = vunpack.c.l.b16 %v111
    %v305 = vunpack.c.h.b16 %v111
    %v306 = vunpack.c.l.b16 %v112
    %v307 = vunpack.c.h.b16 %v112
    %v308 = vunpack.c.l.b16 %v113
    %v309 = vunpack.c.h.b16 %v113
    %v310 = vunpack.c.l.b16 %v114
    %v311 = vunpack.c.h.b16 %v114
    %v312 = vunpack.c.l.b16 %v115
    %v313 = vunpack.c.h.b16 %v115
    %v314 = vunpack.c.l.b16 %v116
    %v315 = vunpack.c.h.b16 %v116
    %v316 = vunpack.c.l.b16 %v117
    %v317 = vunpack.c.h.b16 %v117
    %v318 = vunpack.c.l.b16 %v118
    %v319 = vunpack.c.h.b16 %v118
    %v320 = vunpack.c.l.b16 %v119
    %v321 = vunpack.c.h.b16 %v119
    %v322 = vunpack.c.l.b16 %v120
    %v323 = vunpack.c.h.b16 %v120
    %v324 = vunpack.c.l.b16 %v121
    %v325 = vunpack.c.h.b16 %v121
    %v326 = vunpack.c.l.b16 %v122
    %v327 = vunpack.c.h.b16 %v122
    %v328 = vunpack.c.l.b16 %v123
    %v329 = vunpack.c.h.b16 %v123
    %v330 = vunpack.c.l.b16 %v124
    %v331 = vunpack.c.h.b16 %v124
    %v332 = vunpack.c.l.b16 %v125
    %v333 = vunpack.c.h.b16 %v125
    %v334 = vunpack.c.l.b16 %v126
    %v335 = vunpack.c.h.b16 %v126
    %v336 = vunpack.c.l.b16 %v127
    %v337 = vunpack.c.h.b16 %v127
    %v338 = vunpack.c.l.b16 %v128
    %v339 = vunpack.c.h.b16 %v128
    %v340 = vunpack.c.l.b16 %v129
    %v341 = vunpack.c.h.b16 %v129
    %v342 = vunpack.c.l.b16 %v130
    %v343 = vunpack.c.h.b16 %v130
    %v344 = vunpack.c.l.b16 %v131
    %v345 = vunpack.c.h.b16 %v131
    %v346 = vpack.c.b16 %v222, %v218
    %v347 = vpack.c.b16 %v223, %v219
    %v348 = vpack.c.b16 %v224, %v220
    %v349 = vpack.c.b16 %v225, %v221
    %v350 = vpack.c.b16 %v230, %v226
    %v351 = vpack.c.b16 %v231, %v227
    %v352 = vpack.c.b16 %v232, %v228
    %v353 = vpack.c.b16 %v233, %v229
    %v354 = vpack.c.b16 %v238, %v234
    %v355 = vpack.c.b16 %v239, %v235
    %v356 = vpack.c.b16 %v240, %v236
    %v357 = vpack.c.b16 %v241, %v237
    %v358 = vpack.c.b16 %v246, %v242
    %v359 = vpack.c.b16 %v247, %v243
    %v360 = vpack.c.b16 %v248, %v244
    %v361 = vpack.c.b16 %v249, %v245
    %v362 = vpack.c.b16 %v254, %v250
    %v363 = vpack.c.b16 %v255, %v251
    %v364 = vpack.c.b16 %v256, %v252
    %v365 = vpack.c.b16 %v257, %v253
    %v366 = vpack.c.b16 %v262, %v258
    %v367 = vpack.c.b16 %v263, %v259
    %v368 = vpack.c.b16 %v264, %v260
    %v369 = vpack.c.b16 %v265, %v261
    %v370 = vpack.c.b16 %v270, %v266
    %v371 = vpack.c.b16 %v271, %v267
    %v372 = vpack.c.b16 %v272, %v268
    %v373 = vpack.c.b16 %v273, %v269
    %v374 = vpack.c.b16 %v278, %v274
    %v375 = vpack.c.b16 %v279, %v275
    %v376 = vpack.c.b16 %v280, %v276
    %v377 = vpack.c.b16 %v281, %v277
    %v378 = vpack.c.b16 %v286, %v282
    %v379 = vpack.c.b16 %v287, %v283
    %v380 = vpack.c.b16 %v288, %v284
    %v381 = vpack.c.b16 %v289, %v285
    %v382 = vpack.c.b16 %v294, %v290
    %v383 = vpack.c.b16 %v295, %v291
    %v384 = vpack.c.b16 %v296, %v292
    %v385 = vpack.c.b16 %v297, %v293
    %v386 = vpack.c.b16 %v302, %v298
    %v387 = vpack.c.b16 %v303, %v299
    %v388 = vpack.c.b16 %v304, %v300
    %v389 = vpack.c.b16 %v305, %v301
    %v390 = vpack.c.b16 %v310, %v306
    %v391 = vpack.c.b16 %v311, %v307
    %v392 = vpack.c.b16 %v312, %v308
    %v393 = vpack.c.b16 %v313, %v309
    %v394 = vpack.c.b16 %v318, %v314
    %v395 = vpack.c.b16 %v319, %v315
    %v396 = vpack.c.b16 %v320, %v316
    %v397 = vpack.c.b16 %v321, %v317
    %v398 = vpack.c.b16 %v326, %v322
    %v399 = vpack.c.b16 %v327, %v323
    %v400 = vpack.c.b16 %v328, %v324
    %v401 = vpack.c.b16 %v329, %v325
    %v402 = vpack.c.b16 %v334, %v330
    %v403 = vpack.c.b16 %v335, %v331
    %v404 = vpack.c.b16 %v336, %v332
    %v405 = vpack.c.b16 %v337, %v333
    %v406 = vpack.c.b16 %v342, %v338
    %v407 = vpack.c.b16 %v343, %v339
    %v408 = vpack.c.b16 %v344, %v340
    %v409 = vpack.c.b16 %v345, %v341
    %474 = vmatprep.subr.bf16.mxu0 %v347
    %475 = vmatpush1.bf16.msra.mxu0 %v346
    %476 = vmatprep.subr.bf16.mxu0 %v351
    %477 = vmatpush1.bf16.msra.mxu0 %v350
    %478 = vmatprep.subr.bf16.mxu0 %v355
    %479 = vmatpush1.bf16.msra.mxu0 %v354
    %480 = vmatprep.subr.bf16.mxu0 %v359
    %481 = vmatpush1.bf16.msra.mxu0 %v358
    %482 = vmatprep.subr.bf16.mxu0 %v363
    %483 = vmatpush1.bf16.msra.mxu0 %v362
    %484 = vmatprep.subr.bf16.mxu0 %v367
    %485 = vmatpush1.bf16.msra.mxu0 %v366
    %486 = vmatprep.subr.bf16.mxu0 %v371
    %487 = vmatpush1.bf16.msra.mxu0 %v370
    %488 = vmatprep.subr.bf16.mxu0 %v375
    %489 = vmatpush1.bf16.msra.mxu0 %v374
    %490 = vmatprep.subr.bf16.mxu0 %v379
    %491 = vmatpush1.bf16.msra.mxu0 %v378
    %492 = vmatprep.subr.bf16.mxu0 %v383
    %493 = vmatpush1.bf16.msra.mxu0 %v382
    %494 = vmatprep.subr.bf16.mxu0 %v387
    %495 = vmatpush1.bf16.msra.mxu0 %v386
    %496 = vmatprep.subr.bf16.mxu0 %v391
    %497 = vmatpush1.bf16.msra.mxu0 %v390
    %498 = vmatprep.subr.bf16.mxu0 %v395
    %499 = vmatpush1.bf16.msra.mxu0 %v394
    %500 = vmatprep.subr.bf16.mxu0 %v399
    %501 = vmatpush1.bf16.msra.mxu0 %v398
    %502 = vmatprep.subr.bf16.mxu0 %v403
    %503 = vmatpush1.bf16.msra.mxu0 %v402
    %504 = vmatprep.subr.bf16.mxu0 %v407
    %505 = vmatpush1.bf16.msra.mxu0 %v406
    %506 = vmatprep.mubr.bf16.mxu0 %v67
    %507 = vmatmul.mubr.bf16.gmra.mrb[0].mxu0 %v66
    %v508 = vpop.f32.mrb[0].mxu0
    %v509 = vadd.f32 %v137, %v508
    %v510 = vpop.f32.mrb[0].mxu0
    %v511 = vadd.f32 %v141, %v510
    %v512 = vpop.f32.mrb[0].mxu0
    %v513 = vpop.f32.mrb[0].mxu0
    %514 = vdwg.mxu0
    %515 = vmatprep.subr.bf16.mxu0 %v349
    %516 = vmatpush1.bf16.msra.mxu0 %v348
    %517 = vmatprep.subr.bf16.mxu0 %v353
    %518 = vmatpush1.bf16.msra.mxu0 %v352
    %519 = vmatprep.subr.bf16.mxu0 %v357
    %520 = vmatpush1.bf16.msra.mxu0 %v356
    %521 = vmatprep.subr.bf16.mxu0 %v361
    %522 = vmatpush1.bf16.msra.mxu0 %v360
    %523 = vmatprep.subr.bf16.mxu0 %v365
    %524 = vmatpush1.bf16.msra.mxu0 %v364
    %525 = vmatprep.subr.bf16.mxu0 %v369
    %526 = vmatpush1.bf16.msra.mxu0 %v368
    %527 = vmatprep.subr.bf16.mxu0 %v373
    %528 = vmatpush1.bf16.msra.mxu0 %v372
    %529 = vmatprep.subr.bf16.mxu0 %v377
    %530 = vmatpush1.bf16.msra.mxu0 %v376
    %531 = vmatprep.subr.bf16.mxu0 %v381
    %532 = vmatpush1.bf16.msra.mxu0 %v380
    %533 = vmatprep.subr.bf16.mxu0 %v385
    %534 = vmatpush1.bf16.msra.mxu0 %v384
    %535 = vmatprep.subr.bf16.mxu0 %v389
    %536 = vmatpush1.bf16.msra.mxu0 %v388
    %537 = vmatprep.subr.bf16.mxu0 %v393
    %538 = vmatpush1.bf16.msra.mxu0 %v392
    %539 = vmatprep.subr.bf16.mxu0 %v397
    %540 = vmatpush1.bf16.msra.mxu0 %v396
    %541 = vmatprep.subr.bf16.mxu0 %v401
    %542 = vmatpush1.bf16.msra.mxu0 %v400
    %543 = vmatprep.subr.bf16.mxu0 %v405
    %544 = vmatpush1.bf16.msra.mxu0 %v404
    %545 = vmatprep.subr.bf16.mxu0 %v409
    %546 = vmatpush1.bf16.msra.mxu0 %v408
    %547 = vmatprep.mubr.bf16.mxu0 %v67
    %548 = vmatmul.mubr.bf16.gmra.mrb[0].mxu0 %v66
    %v549 = vpop.f32.mrb[0].mxu0
    %v550 = vadd.f32 %v145, %v549
    %v551 = vpop.f32.mrb[0].mxu0
    %v552 = vadd.f32 %v149, %v551
    %v553 = vpop.f32.mrb[0].mxu0
    %v554 = vpop.f32.mrb[0].mxu0
    %555 = vdwg.mxu0
    %v556 = vpack.c.bf16 %v509, %v509
    %v557 = vpack.c.bf16 %v511, %v511
    %v558 = vpack.c.bf16 %v550, %v550
    %v559 = vpack.c.bf16 %v552, %v552
    %v560 = vld [vmem:[#allocation7] sm:$0xf]
    %v561 = vld [vmem:[#allocation7 + $0x4] sm:$0xf]
    %v562 = vld [vmem:[#allocation7 + $0x8] sm:$0xf]
    %v563 = vld [vmem:[#allocation7 + $0xc] sm:$0xf]
    %v564 = vld [vmem:[#allocation7 + $0x10] sm:$0xf]
    %v565 = vld [vmem:[#allocation7 + $0x14] sm:$0xf]
    %v566 = vld [vmem:[#allocation7 + $0x18] sm:$0xf]
    %v567 = vld [vmem:[#allocation7 + $0x1c] sm:$0xf]
    %v568 = vld [vmem:[#allocation7 + $0x20] sm:$0xf]
    %v569 = vld [vmem:[#allocation7 + $0x24] sm:$0xf]
    %v570 = vld [vmem:[#allocation7 + $0x28] sm:$0xf]
    %v571 = vld [vmem:[#allocation7 + $0x2c] sm:$0xf]
    %v572 = vld [vmem:[#allocation7 + $0x30] sm:$0xf]
    %v573 = vld [vmem:[#allocation7 + $0x34] sm:$0xf]
    %v574 = vld [vmem:[#allocation7 + $0x38] sm:$0xf]
    %v575 = vld [vmem:[#allocation7 + $0x3c] sm:$0xf]
    %v576 = vld [vmem:[#allocation7 + $0x40] sm:$0xf]
    %v577 = vld [vmem:[#allocation7 + $0x44] sm:$0xf]
    %v578 = vld [vmem:[#allocation7 + $0x48] sm:$0xf]
    %v579 = vld [vmem:[#allocation7 + $0x4c] sm:$0xf]
    %v580 = vld [vmem:[#allocation7 + $0x50] sm:$0xf]
    %v581 = vld [vmem:[#allocation7 + $0x54] sm:$0xf]
    %v582 = vld [vmem:[#allocation7 + $0x58] sm:$0xf]
    %v583 = vld [vmem:[#allocation7 + $0x5c] sm:$0xf]
    %v584 = vld [vmem:[#allocation7 + $0x60] sm:$0xf]
    %v585 = vld [vmem:[#allocation7 + $0x64] sm:$0xf]
    %v586 = vld [vmem:[#allocation7 + $0x68] sm:$0xf]
    %v587 = vld [vmem:[#allocation7 + $0x6c] sm:$0xf]
    %v588 = vld [vmem:[#allocation7 + $0x70] sm:$0xf]
    %v589 = vld [vmem:[#allocation7 + $0x74] sm:$0xf]
    %v590 = vld [vmem:[#allocation7 + $0x78] sm:$0xf]
    %v591 = vld [vmem:[#allocation7 + $0x7c] sm:$0xf]
    %v592 = vld [vmem:[#allocation7 + $0x80] sm:$0xf]
    %v593 = vld [vmem:[#allocation7 + $0x84] sm:$0xf]
    %v594 = vld [vmem:[#allocation7 + $0x88] sm:$0xf]
    %v595 = vld [vmem:[#allocation7 + $0x8c] sm:$0xf]
    %v596 = vld [vmem:[#allocation7 + $0x90] sm:$0xf]
    %v597 = vld [vmem:[#allocation7 + $0x94] sm:$0xf]
    %v598 = vld [vmem:[#allocation7 + $0x98] sm:$0xf]
    %v599 = vld [vmem:[#allocation7 + $0x9c] sm:$0xf]
    %v600 = vld [vmem:[#allocation7 + $0xa0] sm:$0xf]
    %v601 = vld [vmem:[#allocation7 + $0xa4] sm:$0xf]
    %v602 = vld [vmem:[#allocation7 + $0xa8] sm:$0xf]
    %v603 = vld [vmem:[#allocation7 + $0xac] sm:$0xf]
    %v604 = vld [vmem:[#allocation7 + $0xb0] sm:$0xf]
    %v605 = vld [vmem:[#allocation7 + $0xb4] sm:$0xf]
    %v606 = vld [vmem:[#allocation7 + $0xb8] sm:$0xf]
    %v607 = vld [vmem:[#allocation7 + $0xbc] sm:$0xf]
    %v608 = vld [vmem:[#allocation7 + $0xc0] sm:$0xf]
    %v609 = vld [vmem:[#allocation7 + $0xc4] sm:$0xf]
    %v610 = vld [vmem:[#allocation7 + $0xc8] sm:$0xf]
    %v611 = vld [vmem:[#allocation7 + $0xcc] sm:$0xf]
    %v612 = vld [vmem:[#allocation7 + $0xd0] sm:$0xf]
    %v613 = vld [vmem:[#allocation7 + $0xd4] sm:$0xf]
    %v614 = vld [vmem:[#allocation7 + $0xd8] sm:$0xf]
    %v615 = vld [vmem:[#allocation7 + $0xdc] sm:$0xf]
    %v616 = vld [vmem:[#allocation7 + $0xe0] sm:$0xf]
    %v617 = vld [vmem:[#allocation7 + $0xe4] sm:$0xf]
    %v618 = vld [vmem:[#allocation7 + $0xe8] sm:$0xf]
    %v619 = vld [vmem:[#allocation7 + $0xec] sm:$0xf]
    %v620 = vld [vmem:[#allocation7 + $0xf0] sm:$0xf]
    %v621 = vld [vmem:[#allocation7 + $0xf4] sm:$0xf]
    %v622 = vld [vmem:[#allocation7 + $0xf8] sm:$0xf]
    %v623 = vld [vmem:[#allocation7 + $0xfc] sm:$0xf]
    %v624 = vld [vmem:[%s4] sm:$0x1]
    %v626 = vlaneseq
    %v627 = vshrl.u32 %v626, 7
    %v628 = vsub.s32 0, %v627
    %v629 = vrot.slane %v624, %v628
    %v695 = vunpack.c.l.b16 %v560
    %v696 = vunpack.c.l.b16 %v561
    %v697 = vunpack.c.l.b16 %v562
    %v698 = vunpack.c.l.b16 %v563
    %v699 = vunpack.c.l.b16 %v564
    %v700 = vunpack.c.l.b16 %v565
    %v701 = vunpack.c.l.b16 %v566
    %v702 = vunpack.c.l.b16 %v567
    %v703 = vunpack.c.l.b16 %v568
    %v704 = vunpack.c.l.b16 %v569
    %v705 = vunpack.c.l.b16 %v570
    %v706 = vunpack.c.l.b16 %v571
    %v707 = vunpack.c.l.b16 %v572
    %v708 = vunpack.c.l.b16 %v573
    %v709 = vunpack.c.l.b16 %v574
    %v710 = vunpack.c.l.b16 %v575
    %v711 = vunpack.c.l.b16 %v576
    %v712 = vunpack.c.l.b16 %v577
    %v713 = vunpack.c.l.b16 %v578
    %v714 = vunpack.c.l.b16 %v579
    %v715 = vunpack.c.l.b16 %v580
    %v716 = vunpack.c.l.b16 %v581
    %v717 = vunpack.c.l.b16 %v582
    %v718 = vunpack.c.l.b16 %v583
    %v719 = vunpack.c.l.b16 %v584
    %v720 = vunpack.c.l.b16 %v585
    %v721 = vunpack.c.l.b16 %v586
    %v722 = vunpack.c.l.b16 %v587
    %v723 = vunpack.c.l.b16 %v588
    %v724 = vunpack.c.l.b16 %v589
    %v725 = vunpack.c.l.b16 %v590
    %v726 = vunpack.c.l.b16 %v591
    %v727 = vunpack.c.l.b16 %v592
    %v728 = vunpack.c.l.b16 %v593
    %v729 = vunpack.c.l.b16 %v594
    %v730 = vunpack.c.l.b16 %v595
    %v731 = vunpack.c.l.b16 %v596
    %v732 = vunpack.c.l.b16 %v597
    %v733 = vunpack.c.l.b16 %v598
    %v734 = vunpack.c.l.b16 %v599
    %v735 = vunpack.c.l.b16 %v600
    %v736 = vunpack.c.l.b16 %v601
    %v737 = vunpack.c.l.b16 %v602
    %v738 = vunpack.c.l.b16 %v603
    %v739 = vunpack.c.l.b16 %v604
    %v740 = vunpack.c.l.b16 %v605
    %v741 = vunpack.c.l.b16 %v606
    %v742 = vunpack.c.l.b16 %v607
    %v743 = vunpack.c.l.b16 %v608
    %v744 = vunpack.c.l.b16 %v609
    %v745 = vunpack.c.l.b16 %v610
    %v746 = vunpack.c.l.b16 %v611
    %v747 = vunpack.c.l.b16 %v612
    %v748 = vunpack.c.l.b16 %v613
    %v749 = vunpack.c.l.b16 %v614
    %v750 = vunpack.c.l.b16 %v615
    %v751 = vunpack.c.l.b16 %v616
    %v752 = vunpack.c.l.b16 %v617
    %v753 = vunpack.c.l.b16 %v618
    %v754 = vunpack.c.l.b16 %v619
    %v755 = vunpack.c.l.b16 %v620
    %v756 = vunpack.c.l.b16 %v621
    %v757 = vunpack.c.l.b16 %v622
    %v758 = vunpack.c.l.b16 %v623
    %v759 = vpack.c.b16 %v696, %v695
    %v760 = vpack.c.b16 %v698, %v697
    %v761 = vpack.c.b16 %v700, %v699
    %v762 = vpack.c.b16 %v702, %v701
    %v763 = vpack.c.b16 %v704, %v703
    %v764 = vpack.c.b16 %v706, %v705
    %v765 = vpack.c.b16 %v708, %v707
    %v766 = vpack.c.b16 %v710, %v709
    %v767 = vpack.c.b16 %v712, %v711
    %v768 = vpack.c.b16 %v714, %v713
    %v769 = vpack.c.b16 %v716, %v715
    %v770 = vpack.c.b16 %v718, %v717
    %v771 = vpack.c.b16 %v720, %v719
    %v772 = vpack.c.b16 %v722, %v721
    %v773 = vpack.c.b16 %v724, %v723
    %v774 = vpack.c.b16 %v726, %v725
    %v775 = vpack.c.b16 %v728, %v727
    %v776 = vpack.c.b16 %v730, %v729
    %v777 = vpack.c.b16 %v732, %v731
    %v778 = vpack.c.b16 %v734, %v733
    %v779 = vpack.c.b16 %v736, %v735
    %v780 = vpack.c.b16 %v738, %v737
    %v781 = vpack.c.b16 %v740, %v739
    %v782 = vpack.c.b16 %v742, %v741
    %v783 = vpack.c.b16 %v744, %v743
    %v784 = vpack.c.b16 %v746, %v745
    %v785 = vpack.c.b16 %v748, %v747
    %v786 = vpack.c.b16 %v750, %v749
    %v787 = vpack.c.b16 %v752, %v751
    %v788 = vpack.c.b16 %v754, %v753
    %v789 = vpack.c.b16 %v756, %v755
    %v790 = vpack.c.b16 %v758, %v757
    %823 = vmatprep.subr.bf16.mxu0 0
    %824 = vmatpush1.bf16.msra.mxu0 %v759
    %825 = vmatprep.subr.bf16.mxu0 0
    %826 = vmatpush1.bf16.msra.mxu0 %v760
    %827 = vmatprep.subr.bf16.mxu0 0
    %828 = vmatpush1.bf16.msra.mxu0 %v761
    %829 = vmatprep.subr.bf16.mxu0 0
    %830 = vmatpush1.bf16.msra.mxu0 %v762
    %831 = vmatprep.subr.bf16.mxu0 0
    %832 = vmatpush1.bf16.msra.mxu0 %v763
    %833 = vmatprep.subr.bf16.mxu0 0
    %834 = vmatpush1.bf16.msra.mxu0 %v764
    %835 = vmatprep.subr.bf16.mxu0 0
    %836 = vmatpush1.bf16.msra.mxu0 %v765
    %837 = vmatprep.subr.bf16.mxu0 0
    %838 = vmatpush1.bf16.msra.mxu0 %v766
    %839 = vmatprep.subr.bf16.mxu0 0
    %840 = vmatpush1.bf16.msra.mxu0 %v767
    %841 = vmatprep.subr.bf16.mxu0 0
    %842 = vmatpush1.bf16.msra.mxu0 %v768
    %843 = vmatprep.subr.bf16.mxu0 0
    %844 = vmatpush1.bf16.msra.mxu0 %v769
    %845 = vmatprep.subr.bf16.mxu0 0
    %846 = vmatpush1.bf16.msra.mxu0 %v770
    %847 = vmatprep.subr.bf16.mxu0 0
    %848 = vmatpush1.bf16.msra.mxu0 %v771
    %849 = vmatprep.subr.bf16.mxu0 0
    %850 = vmatpush1.bf16.msra.mxu0 %v772
    %851 = vmatprep.subr.bf16.mxu0 0
    %852 = vmatpush1.bf16.msra.mxu0 %v773
    %853 = vmatprep.subr.bf16.mxu0 0
    %854 = vmatpush1.bf16.msra.mxu0 %v774
    %855 = vmatprep.mubr.bf16.mxu0 %v557
    %856 = vmatmul.mubr.bf16.gmra.mrb[0].mxu0 %v556
    %v857 = vpop.f32.mrb[0].mxu0
    %v858 = vadd.f32 %v629, %v857
    %v859 = vpop.f32.mrb[0].mxu0
    %v860 = vpop.f32.mrb[0].mxu0
    %v861 = vpop.f32.mrb[0].mxu0
    %862 = vdwg.mxu0
    %863 = vmatprep.subr.bf16.mxu0 0
    %864 = vmatpush1.bf16.msra.mxu0 %v775
    %865 = vmatprep.subr.bf16.mxu0 0
    %866 = vmatpush1.bf16.msra.mxu0 %v776
    %867 = vmatprep.subr.bf16.mxu0 0
    %868 = vmatpush1.bf16.msra.mxu0 %v777
    %869 = vmatprep.subr.bf16.mxu0 0
    %870 = vmatpush1.bf16.msra.mxu0 %v778
    %871 = vmatprep.subr.bf16.mxu0 0
    %872 = vmatpush1.bf16.msra.mxu0 %v779
    %873 = vmatprep.subr.bf16.mxu0 0
    %874 = vmatpush1.bf16.msra.mxu0 %v780
    %875 = vmatprep.subr.bf16.mxu0 0
    %876 = vmatpush1.bf16.msra.mxu0 %v781
    %877 = vmatprep.subr.bf16.mxu0 0
    %878 = vmatpush1.bf16.msra.mxu0 %v782
    %879 = vmatprep.subr.bf16.mxu0 0
    %880 = vmatpush1.bf16.msra.mxu0 %v783
    %881 = vmatprep.subr.bf16.mxu0 0
    %882 = vmatpush1.bf16.msra.mxu0 %v784
    %883 = vmatprep.subr.bf16.mxu0 0
    %884 = vmatpush1.bf16.msra.mxu0 %v785
    %885 = vmatprep.subr.bf16.mxu0 0
    %886 = vmatpush1.bf16.msra.mxu0 %v786
    %887 = vmatprep.subr.bf16.mxu0 0
    %888 = vmatpush1.bf16.msra.mxu0 %v787
    %889 = vmatprep.subr.bf16.mxu0 0
    %890 = vmatpush1.bf16.msra.mxu0 %v788
    %891 = vmatprep.subr.bf16.mxu0 0
    %892 = vmatpush1.bf16.msra.mxu0 %v789
    %893 = vmatprep.subr.bf16.mxu0 0
    %894 = vmatpush1.bf16.msra.mxu0 %v790
    %895 = vmatprep.mubr.bf16.mxu0 %v559
    %896 = vmatmul.mubr.bf16.gmra.mrb[0].mxu0 %v558
    %v897 = vpop.f32.mrb[0].mxu0
    %v898 = vadd.f32 %v858, %v897
    %v899 = vpop.f32.mrb[0].mxu0
    %v900 = vpop.f32.mrb[0].mxu0
    %v901 = vpop.f32.mrb[0].mxu0
    %902 = vdwg.mxu0
    %v903 = vlaneseq
    %v904 = vand.u32 %v903, 127
    %v905 = vand.u32 %v904, 1
    %v906 = vld [vmem:[%s5] sm:$0xff]
    %vm907 = vcmp.eq.s32.totalorder %v905, 0
    %v908 = vsel %vm907, 1, 0
    %vm909 = vcmp.eq.s32.totalorder %v908, 1
    %911 = vset.pattern.permute.xlu0 0
    %912 = vperm.xlu0 %911, %v906
    %v913 = vpop.permute.xlu0 %912
    %915 = vset.pattern.permute.xlu0 1
    %916 = vperm.xlu0 %915, %v906
    %v917 = vpop.permute.xlu0 %916
    %v919 = vsel %vm909, %v913, %v917
    %v920 = vadd.f32 %v898, %v919
    %921 = vst [vmem:[#allocation8] sm:$0xff] %v920
    // Predicated region
    $region38: #{tpu_custom_call.1} parent=1 // pred_check
      _
    $region39: #{tpu_custom_call.1} parent=1 // pred_check_branch
      %923 = sbr.rel (0) target = $region41
    $region40: #{tpu_custom_call.1} parent=1 // pred_region
      %s925 = ssub.s32 128, 128
      %926 = vsyncadd [#allocation4], %s925
      %s928 = sshll.u32 [#allocation8], 4
      %s929 = int_to_ptr.vmem [resolvable:$true] %s928
      %931 = dma.vmem_to_hbm [thread:$0]  %s929, 128, %s6, [#allocation4]
    $region41: #{tpu_custom_call.1} parent=1 // pred_fallthru
      _
    // Predicated region
    $region42: #{tpu_custom_call.1} parent=1 // pred_check
      _
    $region43: #{tpu_custom_call.1} parent=1 // pred_check_branch
      %933 = sbr.rel (0) target = $region45
    $region44: #{tpu_custom_call.1} parent=1 // pred_region
      %934 = dma.done [#allocation4], 128
    $region45: #{tpu_custom_call.1} parent=1 // pred_fallthru
      _
    %935 = vsyncpa [#allocation3], 1
    %936 = vsyncpa [#allocation6], 1
    %937 = vsyncpa [#allocation4], 1

</llo_original>
